<compile_context>
chip_gen: v7x
topology: tpu7x:2x2x1
jax: 0.10.0
libtpu: 0.0.40
codegen_flags: <defaults>
</compile_context>

<pallas_src>
import functools

import jax
import jax.numpy as jnp
from jax.experimental import pallas as pl
from jax.experimental.pallas import tpu as pltpu


def _round_up(x: int, m: int) -> int:
    return ((x + m - 1) // m) * m


def _latency_encoder_kernel(embed_ref, w1_ref, b1_ref, w2_ref, b2_ref, y_ref):
    # First Linear + ReLU (MXU matmul, f32 accumulate; bias-add/ReLU in f32).
    h = jnp.dot(embed_ref[...], w1_ref[...],
                preferred_element_type=jnp.float32) + b1_ref[...]
    h = jnp.maximum(h, 0.0)
    # Second Linear -> (TILE_N, 2H), f32 accumulate.
    y = jnp.dot(h.astype(w2_ref.dtype), w2_ref[...],
                preferred_element_type=jnp.float32) + b2_ref[...]
    # tanh only on the logvar half via a lane mask (EUP tanh + VPU select; no
    # lane-H extract, no second masked store).  The split happens in the wrapper.
    half = y.shape[-1] // 2
    lane = jax.lax.broadcasted_iota(jnp.int32, y.shape, dimension=1)
    y = jnp.where(lane < half, y, jnp.tanh(y))
    y_ref[...] = y.astype(y_ref.dtype)


def tree_lstm_latency_encoder(embed, w1, b1, w2, b2, *,
                              tile_n: int = 1024,
                              compute_dtype=None):
    """embed: (N, D_in); w1: (D_in, H); b1: (1, H); w2: (H, 2H); b2: (1, 2H).

    Returns (z_latency_mu, z_latency_logvar), each (N, H) in embed's dtype.
    compute_dtype: optionally bf16 on v6e/v7x to halve streamed DMA bytes
    (MXU accumulation stays f32; epilogue stays f32; outputs keep embed dtype).
    """
    N, d_in = embed.shape
    H = w1.shape[1]
    out_dtype = embed.dtype

    if compute_dtype is not None:
        embed = embed.astype(compute_dtype)
        w1 = w1.astype(compute_dtype)
        w2 = w2.astype(compute_dtype)
        # Biases stay f32; they are added to f32 accumulators inside the kernel.

    # Row tile: small N -> one tile (rounded to a sublane multiple of 8);
    # large N -> ~tile_n-row tiles so the pipeliner has work to double-buffer.
    if N <= tile_n:
        tn = max(8, _round_up(N, 8))
    else:
        tn = _round_up(tile_n, 8)
    n_pad = _round_up(N, tn)
    if n_pad != N:
        embed = jnp.pad(embed, ((0, n_pad - N), (0, 0)))

    grid = (n_pad // tn,)

    y = pl.pallas_call(
        _latency_encoder_kernel,
        out_shape=jax.ShapeDtypeStruct((n_pad, 2 * H), out_dtype),
        grid=grid,
        in_specs=[
            # Streamed per grid step (double-buffered by the auto-pipeliner).
            pl.BlockSpec((tn, d_in), lambda i: (i, 0)),
            # Constant block index -> DMA'd once, VMEM-resident across steps.
            pl.BlockSpec((d_in, H), lambda i: (0, 0)),
            pl.BlockSpec((1, H), lambda i: (0, 0)),
            pl.BlockSpec((H, 2 * H), lambda i: (0, 0)),
            pl.BlockSpec((1, 2 * H), lambda i: (0, 0)),
        ],
        out_specs=pl.BlockSpec((tn, 2 * H), lambda i: (i, 0)),
        compiler_params=pltpu.CompilerParams(
            dimension_semantics=("parallel",),  # shards rows across v7x's 2 TCs
        ),
    )(embed, w1, b1, w2, b2)

    y = y[:N]
    # Static slices: free in XLA, and they keep the kernel's store lane-dense.
    z_latency_mu = y[:, :H]
    z_latency_logvar = y[:, H:]
    return z_latency_mu, z_latency_logvar


def make_params(key, d_in, h, dtype=jnp.float32):
    """Deterministic synthetic parameters (shapes from module __init__)."""
    k1, k2, k3, k4 = jax.random.split(key, 4)
    w1 = jax.random.normal(k1, (d_in, h), dtype) * 0.1
    b1 = jax.random.normal(k2, (1, h), dtype) * 0.1
    w2 = jax.random.normal(k3, (h, 2 * h), dtype) * 0.1
    b2 = jax.random.normal(k4, (1, 2 * h), dtype) * 0.1
    return w1, b1, w2, b2


if __name__ == "__main__":
    # Config-implied small shapes:
    #   embedding_size = 8, latency_feature_length = 8 -> D_in = 8*3 + 8 = 32
    #   latency_feature_size (H) = 32, N = 8 graph nodes
    embedding_size = 8
    latency_feature_length = 8
    latency_feature_size = 32
    n_nodes = 8
    d_in = embedding_size * 3 + latency_feature_length

    key = jax.random.PRNGKey(0)
    k_embed, k_params = jax.random.split(key)
    embed = jax.random.normal(k_embed, (n_nodes, d_in), jnp.float32)
    w1, b1, w2, b2 = make_params(k_params, d_in, latency_feature_size)

    run = jax.jit(functools.partial(tree_lstm_latency_encoder, tile_n=1024))
    mu, logvar = run(embed, w1, b1, w2, b2)
    jax.block_until_ready((mu, logvar))

    # Pure-JAX reference check
    h_ref = jnp.maximum(embed @ w1 + b1, 0.0)
    y_ref = h_ref @ w2 + b2
    mu_ref, lv_ref = jnp.split(y_ref, 2, axis=-1)
    lv_ref = jnp.tanh(lv_ref)
    assert mu.shape == (n_nodes, latency_feature_size)
    assert logvar.shape == (n_nodes, latency_feature_size)
    assert jnp.allclose(mu, mu_ref, atol=1e-5), "mu mismatch"
    assert jnp.allclose(logvar, lv_ref, atol=1e-5), "logvar mismatch"

    # Exercise the gridded (multi-tile, padded-N) path as well.
    n_big = 2500  # not a multiple of the tile -> tests padding + row grid
    embed_big = jax.random.normal(jax.random.PRNGKey(1), (n_big, d_in), jnp.float32)
    mu_b, lv_b = tree_lstm_latency_encoder(embed_big, w1, b1, w2, b2, tile_n=512)
    jax.block_until_ready((mu_b, lv_b))
    h_b = jnp.maximum(embed_big @ w1 + b1, 0.0)
    y_b = h_b @ w2 + b2
    mu_b_ref, lv_b_ref = jnp.split(y_b, 2, axis=-1)
    assert jnp.allclose(mu_b, mu_b_ref, atol=1e-5), "big mu mismatch"
    assert jnp.allclose(lv_b, jnp.tanh(lv_b_ref), atol=1e-5), "big logvar mismatch"

    print("KERNEL_OK")
</pallas_src>

<mosaic_0001>
module attributes {stable_mosaic.version = 11 : i64} {
  func.func @_latency_encoder_kernel(%arg0: i32, %arg1: memref<8x32xf32, #tpu.memory_space<vmem>>, %arg2: memref<32x32xf32, #tpu.memory_space<vmem>>, %arg3: memref<1x32xf32, #tpu.memory_space<vmem>>, %arg4: memref<32x64xf32, #tpu.memory_space<vmem>>, %arg5: memref<1x64xf32, #tpu.memory_space<vmem>>, %arg6: memref<8x64xf32, #tpu.memory_space<vmem>>) attributes {dimension_semantics = [#tpu.dimension_semantics<parallel>], iteration_bounds = array<i64: 1>, scalar_prefetch = 0 : i64, scratch_operands = 0 : i64, tpu.core_type = #tpu.core_type<tc>, window_params = [{transform_indices = @transform_0, window_bounds = array<i64: 8, 32>}, {pipeline_mode = #tpu.pipeline_mode<synchronous>, transform_indices = @transform_1, window_bounds = array<i64: 32, 32>}, {pipeline_mode = #tpu.pipeline_mode<synchronous>, transform_indices = @transform_2, window_bounds = array<i64: 1, 32>}, {pipeline_mode = #tpu.pipeline_mode<synchronous>, transform_indices = @transform_3, window_bounds = array<i64: 32, 64>}, {pipeline_mode = #tpu.pipeline_mode<synchronous>, transform_indices = @transform_4, window_bounds = array<i64: 1, 64>}, {transform_indices = @transform_5, window_bounds = array<i64: 8, 64>}]} {
    %c0 = arith.constant 0 : index
    %c0_0 = arith.constant 0 : index
    %0 = vector.load %arg1[%c0, %c0_0] : memref<8x32xf32, #tpu.memory_space<vmem>>, vector<8x32xf32>
    %c0_1 = arith.constant 0 : index
    %c0_2 = arith.constant 0 : index
    %1 = vector.load %arg2[%c0_1, %c0_2] : memref<32x32xf32, #tpu.memory_space<vmem>>, vector<32x32xf32>
    %cst = arith.constant dense<0.000000e+00> : vector<8x32xf32>
    %2 = tpu.matmul %0, %1, %cst {dimension_numbers = #tpu.dot_dimension_numbers<[1], [0], [0], [1], [0, 0, 1, 1], [], []>} : vector<8x32xf32>, vector<32x32xf32>, vector<8x32xf32> -> vector<8x32xf32>
    %c0_3 = arith.constant 0 : index
    %c0_4 = arith.constant 0 : index
    %3 = vector.load %arg3[%c0_3, %c0_4] : memref<1x32xf32, #tpu.memory_space<vmem>>, vector<1x32xf32>
    %4 = vector.broadcast %3 : vector<1x32xf32> to vector<8x32xf32>
    %5 = arith.addf %2, %4 : vector<8x32xf32>
    %cst_5 = arith.constant 0.000000e+00 : f32
    %6 = vector.broadcast %cst_5 : f32 to vector<8x32xf32>
    %7 = arith.maximumf %5, %6 : vector<8x32xf32>
    %c0_6 = arith.constant 0 : index
    %c0_7 = arith.constant 0 : index
    %8 = vector.load %arg4[%c0_6, %c0_7] : memref<32x64xf32, #tpu.memory_space<vmem>>, vector<32x64xf32>
    %cst_8 = arith.constant dense<0.000000e+00> : vector<8x64xf32>
    %9 = tpu.matmul %7, %8, %cst_8 {dimension_numbers = #tpu.dot_dimension_numbers<[1], [0], [0], [1], [0, 0, 1, 1], [], []>} : vector<8x32xf32>, vector<32x64xf32>, vector<8x64xf32> -> vector<8x64xf32>
    %c0_9 = arith.constant 0 : index
    %c0_10 = arith.constant 0 : index
    %10 = vector.load %arg5[%c0_9, %c0_10] : memref<1x64xf32, #tpu.memory_space<vmem>>, vector<1x64xf32>
    %11 = vector.broadcast %10 : vector<1x64xf32> to vector<8x64xf32>
    %12 = arith.addf %9, %11 : vector<8x64xf32>
    %13 = tpu.iota {dimensions = array<i32: 1>} : vector<8x64xi32>
    %c32_i32 = arith.constant 32 : i32
    %14 = vector.broadcast %c32_i32 : i32 to vector<8x64xi32>
    %15 = arith.cmpi slt, %13, %14 : vector<8x64xi32>
    %16 = math.tanh %12 : vector<8x64xf32>
    %17 = arith.select %15, %12, %16 : vector<8x64xi1>, vector<8x64xf32>
    %c0_11 = arith.constant 0 : index
    %c0_12 = arith.constant 0 : index
    %18 = vector.load %arg6[%c0_11, %c0_12] : memref<8x64xf32, #tpu.memory_space<vmem>>, vector<8x64xf32>
    tpu.vector_store %arg6[%c0_11, %c0_12], %17 {strides = array<i32>} : memref<8x64xf32, #tpu.memory_space<vmem>>, vector<8x64xf32>,
    return
  }
  func.func @transform_0(%arg0: i32) -> (i32, i32) {
    %c0_i32 = arith.constant 0 : i32
    %c0_i32_0 = arith.constant 0 : i32
    return %arg0, %c0_i32 : i32, i32
  }
  func.func @transform_1(%arg0: i32) -> (i32, i32) {
    %c0_i32 = arith.constant 0 : i32
    %c0_i32_0 = arith.constant 0 : i32
    %c0_i32_1 = arith.constant 0 : i32
    return %c0_i32, %c0_i32_0 : i32, i32
  }
  func.func @transform_2(%arg0: i32) -> (i32, i32) {
    %c0_i32 = arith.constant 0 : i32
    %c0_i32_0 = arith.constant 0 : i32
    %c0_i32_1 = arith.constant 0 : i32
    return %c0_i32, %c0_i32_0 : i32, i32
  }
  func.func @transform_3(%arg0: i32) -> (i32, i32) {
    %c0_i32 = arith.constant 0 : i32
    %c0_i32_0 = arith.constant 0 : i32
    %c0_i32_1 = arith.constant 0 : i32
    return %c0_i32, %c0_i32_0 : i32, i32
  }
  func.func @transform_4(%arg0: i32) -> (i32, i32) {
    %c0_i32 = arith.constant 0 : i32
    %c0_i32_0 = arith.constant 0 : i32
    %c0_i32_1 = arith.constant 0 : i32
    return %c0_i32, %c0_i32_0 : i32, i32
  }
  func.func @transform_5(%arg0: i32) -> (i32, i32) {
    %c0_i32 = arith.constant 0 : i32
    %c0_i32_0 = arith.constant 0 : i32
    return %arg0, %c0_i32 : i32, i32
  }
}

</mosaic_0001>

<llo_original>
// kernel: tree_lstm_latency_encoder.1
$region0: #{tree_lstm_latency_encoder.1}
  #allocation0 [shape = 'u32[]', space=smem, size = 0x4, offset = 0x4, fixed_abs, tag = 'smem constant byte address 0x4 - core index']
  #allocation1 [shape = 'u32[144,128]{1,0:T(1,128)}', space=vmem, size = 0x12000, scoped, tag = 'internal scratch']
  %s0 = inlined_call_operand.hbm [shape: f32[8,32], index: 0, kind: input, shape index: {}]
  %s1 = inlined_call_operand.hbm [shape: f32[32,32], index: 1, kind: input, shape index: {}]
  %s2 = inlined_call_operand.vmem [shape: f32[1,32], index: 2, kind: input, shape index: {}]
  %s3 = inlined_call_operand.hbm [shape: f32[32,64], index: 3, kind: input, shape index: {}]
  %s4 = inlined_call_operand.vmem [shape: f32[1,64], index: 4, kind: input, shape index: {}]
  %s5 = inlined_call_operand.vmem [shape: f32[8,64], index: 5, kind: output, shape index: {}]
  %s6 = sld [smem:[#allocation0]]
  $region42: #{tree_lstm_latency_encoder.1} parent=0
    _
  %s8 = ssub.s32 1, %s6
  %s9 = scalar_select 0, %s8, %s6
  $region1: #{tree_lstm_latency_encoder.1} parent=0
    #allocation2 [shape = 'u8[4096]{0}', space=vmem, size = 0x1000, scoped, tag = 'input window, operand 0, single buffered']
    #allocation3 [shape = 's32[1]{0}', space=sflag, size = 0x4, scoped, tag = 'scoped memory for tree_lstm_latency_encoder.1']
    #allocation4 [shape = 'u8[16384]{0}', space=vmem, size = 0x4000, scoped, tag = 'input window, operand 1, single buffered']
    #allocation5 [shape = 's32[1]{0}', space=sflag, size = 0x4, scoped, tag = 'scoped memory for tree_lstm_latency_encoder.1']
    #allocation6 [shape = 'u8[16384]{0}', space=vmem, size = 0x4000, scoped, tag = 'input window, operand 3, single buffered']
    %10 = vsyncpa [#allocation3], 0
    %11 = vsyncpa [#allocation5], 0
    // Predicated region
    $region2: #{tree_lstm_latency_encoder.1} parent=1 // pred_check
      _
    $region3: #{tree_lstm_latency_encoder.1} parent=1 // pred_check_branch
      %13 = sbr.rel (0) target = $region5
    $region4: #{tree_lstm_latency_encoder.1} parent=1 // pred_region
      %s15 = ssub.s32 128, 128
      %16 = vsyncadd [#allocation3], %s15
      %s18 = sshll.u32 [#allocation2], 4
      %s19 = int_to_ptr.vmem [resolvable:$true] %s18
      %21 = dma.hbm_to_vmem [thread:$0]  %s0, 128, %s19, [#allocation3]
    $region5: #{tree_lstm_latency_encoder.1} parent=1 // pred_fallthru
      _
    // Predicated region
    $region6: #{tree_lstm_latency_encoder.1} parent=1 // pred_check
      _
    $region7: #{tree_lstm_latency_encoder.1} parent=1 // pred_check_branch
      %23 = sbr.rel (0) target = $region9
    $region8: #{tree_lstm_latency_encoder.1} parent=1 // pred_region
      %s25 = ssub.s32 512, 512
      %26 = vsyncadd [#allocation5], %s25
      %s27 = sshll.u32 [#allocation4], 4
      %s28 = int_to_ptr.vmem [resolvable:$true] %s27
      %33 = dma.hbm_to_vmem [thread:$0]  %s1, 512, %s28, [#allocation5], 128, 128, 8
    $region9: #{tree_lstm_latency_encoder.1} parent=1 // pred_fallthru
      _
    // Predicated region
    $region10: #{tree_lstm_latency_encoder.1} parent=1 // pred_check
      _
    $region11: #{tree_lstm_latency_encoder.1} parent=1 // pred_check_branch
      %35 = sbr.rel (0) target = $region13
    $region12: #{tree_lstm_latency_encoder.1} parent=1 // pred_region
      _
    $region13: #{tree_lstm_latency_encoder.1} parent=1 // pred_fallthru
      _
    // Predicated region
    $region14: #{tree_lstm_latency_encoder.1} parent=1 // pred_check
      _
    $region15: #{tree_lstm_latency_encoder.1} parent=1 // pred_check_branch
      %37 = sbr.rel (0) target = $region17
    $region16: #{tree_lstm_latency_encoder.1} parent=1 // pred_region
      %s39 = ssub.s32 512, 512
      %40 = vsyncadd [#allocation5], %s39
      %s41 = sshll.u32 [#allocation6], 4
      %s42 = int_to_ptr.vmem [resolvable:$true] %s41
      %47 = dma.hbm_to_vmem [thread:$0]  %s3, 512, %s42, [#allocation5], 128, 128, 8
    $region17: #{tree_lstm_latency_encoder.1} parent=1 // pred_fallthru
      _
    // Predicated region
    $region18: #{tree_lstm_latency_encoder.1} parent=1 // pred_check
      _
    $region19: #{tree_lstm_latency_encoder.1} parent=1 // pred_check_branch
      %49 = sbr.rel (0) target = $region21
    $region20: #{tree_lstm_latency_encoder.1} parent=1 // pred_region
      _
    $region21: #{tree_lstm_latency_encoder.1} parent=1 // pred_fallthru
      _
    // Predicated region
    $region22: #{tree_lstm_latency_encoder.1} parent=1 // pred_check
      _
    $region23: #{tree_lstm_latency_encoder.1} parent=1 // pred_check_branch
      %51 = sbr.rel (0) target = $region25
    $region24: #{tree_lstm_latency_encoder.1} parent=1 // pred_region
      %52 = dma.done [#allocation3], 128
    $region25: #{tree_lstm_latency_encoder.1} parent=1 // pred_fallthru
      _
    // Predicated region
    $region26: #{tree_lstm_latency_encoder.1} parent=1 // pred_check
      _
    $region27: #{tree_lstm_latency_encoder.1} parent=1 // pred_check_branch
      %54 = sbr.rel (0) target = $region29
    $region28: #{tree_lstm_latency_encoder.1} parent=1 // pred_region
      %55 = dma.done [#allocation5], 512
    $region29: #{tree_lstm_latency_encoder.1} parent=1 // pred_fallthru
      _
    // Predicated region
    $region30: #{tree_lstm_latency_encoder.1} parent=1 // pred_check
      _
    $region31: #{tree_lstm_latency_encoder.1} parent=1 // pred_check_branch
      %57 = sbr.rel (0) target = $region33
    $region32: #{tree_lstm_latency_encoder.1} parent=1 // pred_region
      %58 = dma.done [#allocation5], 512
    $region33: #{tree_lstm_latency_encoder.1} parent=1 // pred_fallthru
      _
    %v59 = vld [vmem:[#allocation2] sm:$0xff]
    %v60 = vld [vmem:[#allocation4] sm:$0xff]
    %v61 = vld [vmem:[#allocation4 + $0x8] sm:$0xff]
    %v62 = vld [vmem:[#allocation4 + $0x10] sm:$0xff]
    %v63 = vld [vmem:[#allocation4 + $0x18] sm:$0xff]
    %v64 = vld [vmem:[%s2] sm:$0x1]
    %v66 = vlaneseq
    %v67 = vshrl.u32 %v66, 7
    %v68 = vsub.s32 0, %v67
    %v69 = vrot.slane %v64, %v68
    %vm71 = vcmask 261120
    %v73 = vsel %vm71, %v59, 0
    %75 = vmatprep.subr.mxu0 0.0
    %76 = vmatpush1.msra.mxu0 %v60
    %77 = vmatprep.subr.mxu0 0.0
    %78 = vmatpush1.msra.mxu0 %v61
    %79 = vmatprep.subr.mxu0 0.0
    %80 = vmatpush1.msra.mxu0 %v62
    %81 = vmatprep.subr.mxu0 0.0
    %82 = vmatpush1.msra.mxu0 %v63
    %83 = vmatprep.subr.mxu0 0.0
    %84 = vmatpush1.msra.mxu0 0.0
    %85 = vmatprep.subr.mxu0 0.0
    %86 = vmatpush1.msra.mxu0 0.0
    %87 = vmatprep.subr.mxu0 0.0
    %88 = vmatpush1.msra.mxu0 0.0
    %89 = vmatprep.subr.mxu0 0.0
    %90 = vmatpush1.msra.mxu0 0.0
    %91 = vmatprep.subr.mxu0 0.0
    %92 = vmatpush1.msra.mxu0 0.0
    %93 = vmatprep.subr.mxu0 0.0
    %94 = vmatpush1.msra.mxu0 0.0
    %95 = vmatprep.subr.mxu0 0.0
    %96 = vmatpush1.msra.mxu0 0.0
    %97 = vmatprep.subr.mxu0 0.0
    %98 = vmatpush1.msra.mxu0 0.0
    %99 = vmatprep.subr.mxu0 0.0
    %100 = vmatpush1.msra.mxu0 0.0
    %101 = vmatprep.subr.mxu0 0.0
    %102 = vmatpush1.msra.mxu0 0.0
    %103 = vmatprep.subr.mxu0 0.0
    %104 = vmatpush1.msra.mxu0 0.0
    %105 = vmatprep.subr.mxu0 0.0
    %106 = vmatpush1.msra.mxu0 0.0
    %107 = vmatprep.subr.mxu0 0.0
    %108 = vmatpush1.msra.mxu0 0.0
    %109 = vmatprep.subr.mxu0 0.0
    %110 = vmatpush1.msra.mxu0 0.0
    %111 = vmatprep.subr.mxu0 0.0
    %112 = vmatpush1.msra.mxu0 0.0
    %113 = vmatprep.subr.mxu0 0.0
    %114 = vmatpush1.msra.mxu0 0.0
    %115 = vmatprep.subr.mxu0 0.0
    %116 = vmatpush1.msra.mxu0 0.0
    %117 = vmatprep.subr.mxu0 0.0
    %118 = vmatpush1.msra.mxu0 0.0
    %119 = vmatprep.subr.mxu0 0.0
    %120 = vmatpush1.msra.mxu0 0.0
    %121 = vmatprep.subr.mxu0 0.0
    %122 = vmatpush1.msra.mxu0 0.0
    %123 = vmatprep.subr.mxu0 0.0
    %124 = vmatpush1.msra.mxu0 0.0
    %125 = vmatprep.subr.mxu0 0.0
    %126 = vmatpush1.msra.mxu0 0.0
    %127 = vmatprep.subr.mxu0 0.0
    %128 = vmatpush1.msra.mxu0 0.0
    %129 = vmatprep.subr.mxu0 0.0
    %130 = vmatpush1.msra.mxu0 0.0
    %131 = vmatprep.subr.mxu0 0.0
    %132 = vmatpush1.msra.mxu0 0.0
    %133 = vmatprep.subr.mxu0 0.0
    %134 = vmatpush1.msra.mxu0 0.0
    %135 = vmatprep.subr.mxu0 0.0
    %136 = vmatpush1.msra.mxu0 0.0
    %137 = vmatprep.subr.mxu0 0.0
    %138 = vmatpush1.msra.mxu0 0.0
    %139 = vmatprep.mubr.f32.mxu0 0.0
    %140 = vmatmul.mubr.f32.gmra.mrb[0].mxu0 %v73
    %v141 = vpop.f32.mrb[0].mxu0
    %v142 = vadd.f32 %v69, %v141
    %v143 = vpop.f32.mrb[0].mxu0
    %144 = vdwg.mxu0
    %v145 = vmax.f32 %v142, 0.0
    %v146 = vld [vmem:[#allocation6] sm:$0xff]
    %v147 = vld [vmem:[#allocation6 + $0x8] sm:$0xff]
    %v148 = vld [vmem:[#allocation6 + $0x10] sm:$0xff]
    %v149 = vld [vmem:[#allocation6 + $0x18] sm:$0xff]
    %v150 = vld [vmem:[%s4] sm:$0x1]
    %v152 = vlaneseq
    %v153 = vshrl.u32 %v152, 7
    %v154 = vsub.s32 0, %v153
    %v155 = vrot.slane %v150, %v154
    %v158 = vsel %vm71, %v145, 0
    %160 = vmatprep.subr.mxu0 0.0
    %161 = vmatpush1.msra.mxu0 %v146
    %162 = vmatprep.subr.mxu0 0.0
    %163 = vmatpush1.msra.mxu0 %v147
    %164 = vmatprep.subr.mxu0 0.0
    %165 = vmatpush1.msra.mxu0 %v148
    %166 = vmatprep.subr.mxu0 0.0
    %167 = vmatpush1.msra.mxu0 %v149
    %168 = vmatprep.subr.mxu0 0.0
    %169 = vmatpush1.msra.mxu0 0.0
    %170 = vmatprep.subr.mxu0 0.0
    %171 = vmatpush1.msra.mxu0 0.0
    %172 = vmatprep.subr.mxu0 0.0
    %173 = vmatpush1.msra.mxu0 0.0
    %174 = vmatprep.subr.mxu0 0.0
    %175 = vmatpush1.msra.mxu0 0.0
    %176 = vmatprep.subr.mxu0 0.0
    %177 = vmatpush1.msra.mxu0 0.0
    %178 = vmatprep.subr.mxu0 0.0
    %179 = vmatpush1.msra.mxu0 0.0
    %180 = vmatprep.subr.mxu0 0.0
    %181 = vmatpush1.msra.mxu0 0.0
    %182 = vmatprep.subr.mxu0 0.0
    %183 = vmatpush1.msra.mxu0 0.0
    %184 = vmatprep.subr.mxu0 0.0
    %185 = vmatpush1.msra.mxu0 0.0
    %186 = vmatprep.subr.mxu0 0.0
    %187 = vmatpush1.msra.mxu0 0.0
    %188 = vmatprep.subr.mxu0 0.0
    %189 = vmatpush1.msra.mxu0 0.0
    %190 = vmatprep.subr.mxu0 0.0
    %191 = vmatpush1.msra.mxu0 0.0
    %192 = vmatprep.subr.mxu0 0.0
    %193 = vmatpush1.msra.mxu0 0.0
    %194 = vmatprep.subr.mxu0 0.0
    %195 = vmatpush1.msra.mxu0 0.0
    %196 = vmatprep.subr.mxu0 0.0
    %197 = vmatpush1.msra.mxu0 0.0
    %198 = vmatprep.subr.mxu0 0.0
    %199 = vmatpush1.msra.mxu0 0.0
    %200 = vmatprep.subr.mxu0 0.0
    %201 = vmatpush1.msra.mxu0 0.0
    %202 = vmatprep.subr.mxu0 0.0
    %203 = vmatpush1.msra.mxu0 0.0
    %204 = vmatprep.subr.mxu0 0.0
    %205 = vmatpush1.msra.mxu0 0.0
    %206 = vmatprep.subr.mxu0 0.0
    %207 = vmatpush1.msra.mxu0 0.0
    %208 = vmatprep.subr.mxu0 0.0
    %209 = vmatpush1.msra.mxu0 0.0
    %210 = vmatprep.subr.mxu0 0.0
    %211 = vmatpush1.msra.mxu0 0.0
    %212 = vmatprep.subr.mxu0 0.0
    %213 = vmatpush1.msra.mxu0 0.0
    %214 = vmatprep.subr.mxu0 0.0
    %215 = vmatpush1.msra.mxu0 0.0
    %216 = vmatprep.subr.mxu0 0.0
    %217 = vmatpush1.msra.mxu0 0.0
    %218 = vmatprep.subr.mxu0 0.0
    %219 = vmatpush1.msra.mxu0 0.0
    %220 = vmatprep.subr.mxu0 0.0
    %221 = vmatpush1.msra.mxu0 0.0
    %222 = vmatprep.subr.mxu0 0.0
    %223 = vmatpush1.msra.mxu0 0.0
    %224 = vmatprep.mubr.f32.mxu0 0.0
    %225 = vmatmul.mubr.f32.gmra.mrb[0].mxu0 %v158
    %v226 = vpop.f32.mrb[0].mxu0
    %v227 = vadd.f32 %v155, %v226
    %v228 = vpop.f32.mrb[0].mxu0
    %229 = vdwg.mxu0
    %v230 = vlaneseq
    %v231 = vand.u32 %v230, 127
    %vm232 = vcmp.lt.s32.totalorder %v231, 32
    %v233 = vtanh.pop %v227
    %v234 = vsel %vm232, %v227, %v233
    %vm235 = vcmask 523264
    %236 = vst.msk [vmem:[%s5] sm:$0xff] %vm235, %v234
    // Predicated region
    $region34: #{tree_lstm_latency_encoder.1} parent=1 // pred_check
      _
    $region35: #{tree_lstm_latency_encoder.1} parent=1 // pred_check_branch
      %238 = sbr.rel (0) target = $region37
    $region36: #{tree_lstm_latency_encoder.1} parent=1 // pred_region
      _
    $region37: #{tree_lstm_latency_encoder.1} parent=1 // pred_fallthru
      _
    // Predicated region
    $region38: #{tree_lstm_latency_encoder.1} parent=1 // pred_check
      _
    $region39: #{tree_lstm_latency_encoder.1} parent=1 // pred_check_branch
      %240 = sbr.rel (0) target = $region41
    $region40: #{tree_lstm_latency_encoder.1} parent=1 // pred_region
      _
    $region41: #{tree_lstm_latency_encoder.1} parent=1 // pred_fallthru
      _
    %241 = vsyncpa [#allocation3], 1
    %242 = vsyncpa [#allocation5], 1

</llo_original>
